<compile_context>
chip_gen: v7x
topology: tpu7x:2x2x1
jax: 0.10.0
libtpu: 0.0.40
codegen_flags: <defaults>
</compile_context>

<pallas_src>
import functools
import math

import jax
import jax.numpy as jnp
from jax.experimental import pallas as pl
from jax.experimental.pallas import tpu as pltpu


_SUBLANE = 8
_TILE_BYTES_TARGET = 2 * 1024 * 1024      # ~2 MiB per row-block per stream
_MAX_ROW_TILE = 1024
_VMEM_LIMIT_BYTES = 48 * 1024 * 1024      # safe on v5e/v6e (128 MiB) and v7x (64 MiB)


def _choose_row_tile(rows, bytes_per_row, row_tile=None):
    """Rows per block: ~2 MiB blocks, multiple of 8, capped at 1024.

    If the whole problem fits in one block we use the full row count (a block
    dim equal to the full array dim is always a legal TPU block shape).
    """
    if row_tile is None:
        budget = _TILE_BYTES_TARGET // max(1, bytes_per_row)
        budget = max(_SUBLANE, (budget // _SUBLANE) * _SUBLANE)
        row_tile = min(budget, _MAX_ROW_TILE)
    if rows <= row_tile:
        return rows
    return max(_SUBLANE, (row_tile // _SUBLANE) * _SUBLANE)


def _layernorm_math(s, gamma, beta, *, eps, features):
    """Torch-convention LayerNorm on an f32 (rows, features) tile.

    Matches torch: unbiased variance (divide by N-1), eps added to std.
    """
    mean = jnp.mean(s, axis=-1, keepdims=True)
    diff = s - mean
    var = jnp.sum(diff * diff, axis=-1, keepdims=True) / jnp.float32(features - 1)
    denom = jnp.sqrt(var) + jnp.float32(eps)           # (rows, 1)
    # EUP reciprocal on the (rows, 1) vector + one Newton step -> ~f32 exact,
    # so the 1e-5 self-check tolerance still holds.
    inv = pl.reciprocal(denom, approx=True)
    inv = inv * (2.0 - denom * inv)
    return diff * inv * gamma + beta


def _layer_norm_kernel(x_ref, g_ref, b_ref, o_ref, *, eps, features):
    x = x_ref[...].astype(jnp.float32)
    gamma = g_ref[...].astype(jnp.float32)
    beta = b_ref[...].astype(jnp.float32)
    y = _layernorm_math(x, gamma, beta, eps=eps, features=features)
    o_ref[...] = y.astype(o_ref.dtype)


def _ffn_kernel(x_ref, w1_ref, b1_ref, w2_ref, b2_ref, g_ref, bb_ref, o_ref,
                *, eps, features):
    x = x_ref[...]
    # MLP: Linear -> ReLU -> (dropout = identity at inference) -> Linear
    h = jnp.dot(x, w1_ref[...], preferred_element_type=jnp.float32)
    h = jnp.maximum(h + b1_ref[...].astype(jnp.float32), 0.0)
    y = jnp.dot(h.astype(w2_ref.dtype), w2_ref[...],
                preferred_element_type=jnp.float32)
    y = y + b2_ref[...].astype(jnp.float32)
    s = x.astype(jnp.float32) + y                       # residual add
    gamma = g_ref[...].astype(jnp.float32)
    beta = bb_ref[...].astype(jnp.float32)
    out = _layernorm_math(s, gamma, beta, eps=eps, features=features)
    o_ref[...] = out.astype(o_ref.dtype)


def layer_norm(x, a_2, b_2, eps=1e-6, row_tile=None):
    """Pallas LayerNorm over the last axis of x (torch std+eps convention)."""
    features = x.shape[-1]
    assert features >= 2, "unbiased std (ddof=1) needs features >= 2"
    lead = x.shape[:-1]
    rows = math.prod(lead) if lead else 1
    x2 = x.reshape(rows, features)
    gamma = a_2.reshape(1, features)
    beta = b_2.reshape(1, features)

    itemsize = jnp.dtype(x.dtype).itemsize
    rt = _choose_row_tile(rows, features * max(itemsize, 4), row_tile)
    grid = (pl.cdiv(rows, rt),)   # ragged last block handled by Pallas masking

    kernel = functools.partial(_layer_norm_kernel, eps=eps, features=features)
    out = pl.pallas_call(
        kernel,
        out_shape=jax.ShapeDtypeStruct((rows, features), x.dtype),
        grid_spec=pltpu.PrefetchScalarGridSpec(
            num_scalar_prefetch=0,
            grid=grid,
            in_specs=[
                pl.BlockSpec((rt, features), lambda i: (i, 0)),
                pl.BlockSpec((1, features), lambda i: (0, 0)),
                pl.BlockSpec((1, features), lambda i: (0, 0)),
            ],
            out_specs=pl.BlockSpec((rt, features), lambda i: (i, 0)),
        ),
        compiler_params=pltpu.CompilerParams(
            dimension_semantics=("parallel",),
            vmem_limit_bytes=_VMEM_LIMIT_BYTES,
        ),
    )(x2, gamma, beta)
    return out.reshape(x.shape)


def ffn_forward(x, w1, b1, w2, b2, a_2, b_2, eps=1e-6, row_tile=None):
    """FFN.forward(x) = LayerNorm(x + MLP(x)), dropout as identity (eval)."""
    in_size = x.shape[-1]
    mid_size = w1.shape[-1]
    out_size = w2.shape[-1]
    assert w1.shape[0] == in_size and w2.shape[0] == mid_size
    assert out_size == in_size, "residual add requires out_size == in_size"
    assert in_size >= 2

    lead = x.shape[:-1]
    rows = math.prod(lead) if lead else 1
    x2 = x.reshape(rows, in_size)
    b1r = b1.reshape(1, mid_size)
    b2r = b2.reshape(1, out_size)
    gamma = a_2.reshape(1, in_size)
    beta = b_2.reshape(1, in_size)

    # Fused kernel keeps both weights resident in VMEM (constant index_map).
    w_bytes = (w1.size * jnp.dtype(w1.dtype).itemsize
               + w2.size * jnp.dtype(w2.dtype).itemsize)
    assert w_bytes <= 24 * 1024 * 1024, "weights too large for the fused kernel"
    # TODO(synk): K/N-tile the two matmuls for very large mid_size instead of
    # keeping the full weight matrices resident in VMEM.

    itemsize = jnp.dtype(x.dtype).itemsize
    bytes_per_row = (in_size + mid_size + out_size) * max(itemsize, 4)
    rt = _choose_row_tile(rows, bytes_per_row, row_tile)
    grid = (pl.cdiv(rows, rt),)

    kernel = functools.partial(_ffn_kernel, eps=eps, features=in_size)
    out = pl.pallas_call(
        kernel,
        out_shape=jax.ShapeDtypeStruct((rows, in_size), x.dtype),
        grid_spec=pltpu.PrefetchScalarGridSpec(
            num_scalar_prefetch=0,
            grid=grid,
            in_specs=[
                pl.BlockSpec((rt, in_size), lambda i: (i, 0)),         # x
                pl.BlockSpec((in_size, mid_size), lambda i: (0, 0)),   # w1
                pl.BlockSpec((1, mid_size), lambda i: (0, 0)),         # b1
                pl.BlockSpec((mid_size, out_size), lambda i: (0, 0)),  # w2
                pl.BlockSpec((1, out_size), lambda i: (0, 0)),         # b2
                pl.BlockSpec((1, in_size), lambda i: (0, 0)),          # gamma
                pl.BlockSpec((1, in_size), lambda i: (0, 0)),          # beta
            ],
            out_specs=pl.BlockSpec((rt, in_size), lambda i: (i, 0)),
        ),
        compiler_params=pltpu.CompilerParams(
            dimension_semantics=("parallel",),
            vmem_limit_bytes=_VMEM_LIMIT_BYTES,
        ),
    )(x2, w1, b1r, w2, b2r, gamma, beta)
    return out.reshape(x.shape)


# ------------------------- pure-JAX references ------------------------------

def layer_norm_reference(x, a_2, b_2, eps=1e-6):
    mean = jnp.mean(x, axis=-1, keepdims=True)
    std = jnp.std(x, axis=-1, keepdims=True, ddof=1)   # torch.std is unbiased
    return a_2 * (x - mean) / (std + eps) + b_2


def ffn_reference(x, w1, b1, w2, b2, a_2, b_2, eps=1e-6):
    hp = jax.lax.Precision.HIGHEST
    h = jnp.maximum(jnp.dot(x, w1, precision=hp) + b1, 0.0)
    y = jnp.dot(h, w2, precision=hp) + b2
    return layer_norm_reference(x + y, a_2, b_2, eps=eps)


if __name__ == "__main__":
    key = jax.random.PRNGKey(0)
    k_x, k_w1, k_b1, k_w2, k_b2 = jax.random.split(key, 5)

    batch, seq = 2, 8
    in_size, mid_size, out_size = 128, 256, 128   # lane-dense feature axes
    eps = 1e-6

    x = jax.random.normal(k_x, (batch, seq, in_size), dtype=jnp.float32)
    w1 = jax.random.normal(k_w1, (in_size, mid_size), dtype=jnp.float32) / math.sqrt(in_size)
    b1 = jax.random.normal(k_b1, (mid_size,), dtype=jnp.float32) * 0.01
    w2 = jax.random.normal(k_w2, (mid_size, out_size), dtype=jnp.float32) / math.sqrt(mid_size)
    b2 = jax.random.normal(k_b2, (out_size,), dtype=jnp.float32) * 0.01
    a_2 = jnp.ones((in_size,), dtype=jnp.float32)    # LayerNorm scale init (torch.ones)
    b_2 = jnp.zeros((in_size,), dtype=jnp.float32)   # LayerNorm shift init (torch.zeros)

    # 1) standalone LayerNorm kernel, tight tolerance.
    ln_out = jax.block_until_ready(layer_norm(x, a_2, b_2, eps=eps))
    ln_ref = layer_norm_reference(x, a_2, b_2, eps=eps)
    assert ln_out.shape == x.shape
    assert jnp.allclose(ln_out, ln_ref, atol=1e-5, rtol=1e-5), "layer_norm mismatch"

    # 2) fully fused FFN kernel (MLP + residual + LayerNorm).  Slightly looser
    #    tolerance: the in-kernel f32 matmuls run on the MXU via multi-pass
    #    decomposition whose rounding/accumulation order can differ from the
    #    HIGHEST-precision XLA reference dot.
    out = jax.block_until_ready(ffn_forward(x, w1, b1, w2, b2, a_2, b_2, eps=eps))
    ref = ffn_reference(x, w1, b1, w2, b2, a_2, b_2, eps=eps)
    assert out.shape == x.shape
    assert jnp.allclose(out, ref, atol=1e-3, rtol=1e-3), "ffn mismatch"

    print("KERNEL_OK")
</pallas_src>

<mosaic_0001>
module attributes {stable_mosaic.version = 11 : i64} {
  func.func @_layer_norm_kernel(%arg0: i32, %arg1: memref<16x128xf32, #tpu.memory_space<vmem>>, %arg2: memref<1x128xf32, #tpu.memory_space<vmem>>, %arg3: memref<1x128xf32, #tpu.memory_space<vmem>>, %arg4: memref<16x128xf32, #tpu.memory_space<vmem>>) attributes {dimension_semantics = [#tpu.dimension_semantics<parallel>], iteration_bounds = array<i64: 1>, scalar_prefetch = 0 : i64, scratch_operands = 0 : i64, tpu.core_type = #tpu.core_type<tc>, window_params = [{transform_indices = @transform_0, window_bounds = array<i64: 16, 128>}, {pipeline_mode = #tpu.pipeline_mode<synchronous>, transform_indices = @transform_1, window_bounds = array<i64: 1, 128>}, {pipeline_mode = #tpu.pipeline_mode<synchronous>, transform_indices = @transform_2, window_bounds = array<i64: 1, 128>}, {transform_indices = @transform_3, window_bounds = array<i64: 16, 128>}]} {
    %c0 = arith.constant 0 : index
    %c0_0 = arith.constant 0 : index
    %0 = vector.load %arg1[%c0, %c0_0] : memref<16x128xf32, #tpu.memory_space<vmem>>, vector<16x128xf32>
    %c0_1 = arith.constant 0 : index
    %c0_2 = arith.constant 0 : index
    %1 = vector.load %arg2[%c0_1, %c0_2] : memref<1x128xf32, #tpu.memory_space<vmem>>, vector<1x128xf32>
    %c0_3 = arith.constant 0 : index
    %c0_4 = arith.constant 0 : index
    %2 = vector.load %arg3[%c0_3, %c0_4] : memref<1x128xf32, #tpu.memory_space<vmem>>, vector<1x128xf32>
    %cst = arith.constant dense<0.000000e+00> : vector<16xf32>
    %3 = vector.multi_reduction <add>, %0, %cst [1] : vector<16x128xf32> to vector<16xf32>
    %4 = vector.shape_cast %3 : vector<16xf32> to vector<16x1xf32>
    %cst_5 = arith.constant 1.280000e+02 : f32
    %5 = vector.broadcast %cst_5 : f32 to vector<16x1xf32>
    %6 = arith.divf %4, %5 : vector<16x1xf32>
    %7 = vector.broadcast %6 : vector<16x1xf32> to vector<16x128xf32>
    %8 = arith.subf %0, %7 : vector<16x128xf32>
    %9 = arith.mulf %8, %8 : vector<16x128xf32>
    %cst_6 = arith.constant dense<0.000000e+00> : vector<16xf32>
    %10 = vector.multi_reduction <add>, %9, %cst_6 [1] : vector<16x128xf32> to vector<16xf32>
    %11 = vector.shape_cast %10 : vector<16xf32> to vector<16x1xf32>
    %cst_7 = arith.constant 1.270000e+02 : f32
    %12 = vector.broadcast %cst_7 : f32 to vector<16x1xf32>
    %13 = arith.divf %11, %12 : vector<16x1xf32>
    %14 = math.sqrt %13 : vector<16x1xf32>
    %cst_8 = arith.constant 9.99999997E-7 : f32
    %15 = vector.broadcast %cst_8 : f32 to vector<16x1xf32>
    %16 = arith.addf %14, %15 : vector<16x1xf32>
    %17 = tpu.reciprocal %16 {approx = true} : vector<16x1xf32> -> vector<16x1xf32>
    %18 = arith.mulf %16, %17 : vector<16x1xf32>
    %cst_9 = arith.constant 2.000000e+00 : f32
    %19 = vector.broadcast %cst_9 : f32 to vector<16x1xf32>
    %20 = arith.subf %19, %18 : vector<16x1xf32>
    %21 = arith.mulf %17, %20 : vector<16x1xf32>
    %22 = vector.broadcast %21 : vector<16x1xf32> to vector<16x128xf32>
    %23 = arith.mulf %8, %22 : vector<16x128xf32>
    %24 = vector.broadcast %1 : vector<1x128xf32> to vector<16x128xf32>
    %25 = arith.mulf %23, %24 : vector<16x128xf32>
    %26 = vector.broadcast %2 : vector<1x128xf32> to vector<16x128xf32>
    %27 = arith.addf %25, %26 : vector<16x128xf32>
    %c0_10 = arith.constant 0 : index
    %c0_11 = arith.constant 0 : index
    %28 = vector.load %arg4[%c0_10, %c0_11] : memref<16x128xf32, #tpu.memory_space<vmem>>, vector<16x128xf32>
    tpu.vector_store %arg4[%c0_10, %c0_11], %27 {strides = array<i32>} : memref<16x128xf32, #tpu.memory_space<vmem>>, vector<16x128xf32>,
    return
  }
  func.func @transform_0(%arg0: i32) -> (i32, i32) {
    %c0_i32 = arith.constant 0 : i32
    %c0_i32_0 = arith.constant 0 : i32
    return %arg0, %c0_i32 : i32, i32
  }
  func.func @transform_1(%arg0: i32) -> (i32, i32) {
    %c0_i32 = arith.constant 0 : i32
    %c0_i32_0 = arith.constant 0 : i32
    %c0_i32_1 = arith.constant 0 : i32
    return %c0_i32, %c0_i32_0 : i32, i32
  }
  func.func @transform_2(%arg0: i32) -> (i32, i32) {
    %c0_i32 = arith.constant 0 : i32
    %c0_i32_0 = arith.constant 0 : i32
    %c0_i32_1 = arith.constant 0 : i32
    return %c0_i32, %c0_i32_0 : i32, i32
  }
  func.func @transform_3(%arg0: i32) -> (i32, i32) {
    %c0_i32 = arith.constant 0 : i32
    %c0_i32_0 = arith.constant 0 : i32
    return %arg0, %c0_i32 : i32, i32
  }
}

</mosaic_0001>

<llo_original>
// kernel: tpu_custom_call.1
$region0: #{tpu_custom_call.1}
  #allocation0 [shape = 'u32[]', space=smem, size = 0x4, offset = 0x4, fixed_abs, tag = 'smem constant byte address 0x4 - core index']
  #allocation1 [shape = 'u32[144,128]{1,0:T(1,128)}', space=vmem, size = 0x12000, scoped, tag = 'internal scratch']
  %s0 = inlined_call_operand.hbm [shape: f32[16,128], index: 0, kind: input, shape index: {}]
  %s1 = inlined_call_operand.vmem [shape: f32[1,128], index: 1, kind: input, shape index: {}]
  %s2 = inlined_call_operand.vmem [shape: f32[1,128], index: 2, kind: input, shape index: {}]
  %s3 = inlined_call_operand.hbm [shape: f32[16,128], index: 3, kind: output, shape index: {}]
  %s4 = sld [smem:[#allocation0]]
  $region26: #{tpu_custom_call.1} parent=0
    _
  %s6 = ssub.s32 1, %s4
  %s7 = scalar_select 0, %s6, %s4
  $region1: #{tpu_custom_call.1} parent=0
    #allocation2 [shape = 'u8[8192]{0}', space=vmem, size = 0x2000, scoped, tag = 'input window, operand 0, single buffered']
    #allocation3 [shape = 's32[1]{0}', space=sflag, size = 0x4, scoped, tag = 'scoped memory for tpu_custom_call.1']
    #allocation4 [shape = 's32[1]{0}', space=sflag, size = 0x4, scoped, tag = 'scoped memory for tpu_custom_call.1']
    #allocation5 [shape = 'u8[8192]{0}', space=vmem, size = 0x2000, scoped, tag = 'output window, operand 0, single buffered']
    %8 = vsyncpa [#allocation3], 0
    %9 = vsyncpa [#allocation4], 0
    // Predicated region
    $region2: #{tpu_custom_call.1} parent=1 // pred_check
      _
    $region3: #{tpu_custom_call.1} parent=1 // pred_check_branch
      %11 = sbr.rel (0) target = $region5
    $region4: #{tpu_custom_call.1} parent=1 // pred_region
      %s13 = ssub.s32 256, 256
      %14 = vsyncadd [#allocation3], %s13
      %s15 = sshll.u32 [#allocation2], 4
      %s16 = int_to_ptr.vmem [resolvable:$true] %s15
      %21 = dma.hbm_to_vmem [thread:$0]  %s0, 256, %s16, [#allocation3], 128, 128, 8
    $region5: #{tpu_custom_call.1} parent=1 // pred_fallthru
      _
    // Predicated region
    $region6: #{tpu_custom_call.1} parent=1 // pred_check
      _
    $region7: #{tpu_custom_call.1} parent=1 // pred_check_branch
      %23 = sbr.rel (0) target = $region9
    $region8: #{tpu_custom_call.1} parent=1 // pred_region
      _
    $region9: #{tpu_custom_call.1} parent=1 // pred_fallthru
      _
    // Predicated region
    $region10: #{tpu_custom_call.1} parent=1 // pred_check
      _
    $region11: #{tpu_custom_call.1} parent=1 // pred_check_branch
      %25 = sbr.rel (0) target = $region13
    $region12: #{tpu_custom_call.1} parent=1 // pred_region
      _
    $region13: #{tpu_custom_call.1} parent=1 // pred_fallthru
      _
    // Predicated region
    $region14: #{tpu_custom_call.1} parent=1 // pred_check
      _
    $region15: #{tpu_custom_call.1} parent=1 // pred_check_branch
      %27 = sbr.rel (0) target = $region17
    $region16: #{tpu_custom_call.1} parent=1 // pred_region
      %28 = dma.done [#allocation3], 256
    $region17: #{tpu_custom_call.1} parent=1 // pred_fallthru
      _
    %v29 = vld [vmem:[#allocation2] sm:$0xff]
    %v30 = vld [vmem:[#allocation2 + $0x8] sm:$0xff]
    %v31 = vld [vmem:[%s1] sm:$0x1]
    %v32 = vld [vmem:[%s2] sm:$0x1]
    %33 = vadd.xlane.f32.xlu0 %v29
    %v34 = vpop.xlane.xlu0 %33
    %35 = vadd.xlane.f32.xlu0 %v30
    %v36 = vpop.xlane.xlu0 %35
    %v37 = vrcp.pop 128.0
    %v38 = vmul.f32 %v34, %v37
    %v39 = vmul.f32 %v36, %v37
    %v40 = vsub.f32 %v29, %v38
    %v41 = vsub.f32 %v30, %v39
    %v42 = vmul.f32 %v40, %v40
    %v43 = vmul.f32 %v41, %v41
    %44 = vadd.xlane.f32.xlu0 %v42
    %v45 = vpop.xlane.xlu0 %44
    %46 = vadd.xlane.f32.xlu0 %v43
    %v47 = vpop.xlane.xlu0 %46
    %v48 = vrcp.pop 127.0
    %v49 = vmul.f32 %v45, %v48
    %v50 = vmul.f32 %v47, %v48
    %v51 = vrsqrt.pop %v49
    %v52 = vmul.f32 %v49, %v51
    %vm53 = vcmp.eq.f32.partialorder %v49, inf
    %v54 = vsel %vm53, %v49, %v52
    %vm55 = vcmp.eq.f32.partialorder %v49, 0.0
    %v56 = vand.u32 %v49, 2147483648
    %v57 = vsel %vm55, %v56, %v54
    %v58 = vrsqrt.pop %v50
    %v59 = vmul.f32 %v50, %v58
    %vm60 = vcmp.eq.f32.partialorder %v50, inf
    %v61 = vsel %vm60, %v50, %v59
    %vm62 = vcmp.eq.f32.partialorder %v50, 0.0
    %v63 = vand.u32 %v50, 2147483648
    %v64 = vsel %vm62, %v63, %v61
    %v65 = vadd.f32 %v57, 1e-06
    %v66 = vadd.f32 %v64, 1e-06
    %v67 = vrcp.pop %v65
    %v68 = vrcp.pop %v66
    %v69 = vmul.f32 %v65, %v67
    %v70 = vmul.f32 %v66, %v68
    %v71 = vsub.f32 2.0, %v69
    %v72 = vsub.f32 2.0, %v70
    %v73 = vmul.f32 %v67, %v71
    %v74 = vmul.f32 %v68, %v72
    %v75 = vmul.f32 %v40, %v73
    %v76 = vmul.f32 %v41, %v74
    %v78 = vlaneseq
    %v79 = vshrl.u32 %v78, 7
    %v80 = vsub.s32 0, %v79
    %v81 = vrot.slane %v31, %v80
    %v83 = vmul.f32 %v75, %v81
    %v84 = vmul.f32 %v76, %v81
    %v86 = vlaneseq
    %v87 = vshrl.u32 %v86, 7
    %v88 = vsub.s32 0, %v87
    %v89 = vrot.slane %v32, %v88
    %v91 = vadd.f32 %v83, %v89
    %v92 = vadd.f32 %v84, %v89
    %93 = vst [vmem:[#allocation5] sm:$0xff] %v91
    %94 = vst [vmem:[#allocation5 + $0x8] sm:$0xff] %v92
    // Predicated region
    $region18: #{tpu_custom_call.1} parent=1 // pred_check
      _
    $region19: #{tpu_custom_call.1} parent=1 // pred_check_branch
      %96 = sbr.rel (0) target = $region21
    $region20: #{tpu_custom_call.1} parent=1 // pred_region
      %s98 = ssub.s32 256, 256
      %99 = vsyncadd [#allocation4], %s98
      %s100 = sshll.u32 [#allocation5], 4
      %s101 = int_to_ptr.vmem [resolvable:$true] %s100
      %106 = dma.vmem_to_hbm [thread:$0]  %s101, 256, %s3, [#allocation4], 128, 128, 8
    $region21: #{tpu_custom_call.1} parent=1 // pred_fallthru
      _
    // Predicated region
    $region22: #{tpu_custom_call.1} parent=1 // pred_check
      _
    $region23: #{tpu_custom_call.1} parent=1 // pred_check_branch
      %108 = sbr.rel (0) target = $region25
    $region24: #{tpu_custom_call.1} parent=1 // pred_region
      %109 = dma.done [#allocation4], 256
    $region25: #{tpu_custom_call.1} parent=1 // pred_fallthru
      _
    %110 = vsyncpa [#allocation3], 1
    %111 = vsyncpa [#allocation4], 1

</llo_original>
